<compile_context>
chip_gen: v7x
topology: tpu7x:2x2x1
jax: 0.10.0
libtpu: 0.0.40
codegen_flags: <defaults>
</compile_context>

<pallas_src>
import functools

import jax
import jax.numpy as jnp
from jax.experimental import pallas as pl
from jax.experimental.pallas import tpu as pltpu

DROPOUT_PS = (0.1, 0.2, 0.3, 0.4, 0.5)  # np.linspace(0.1, 0.5, 5)
LANE = 128
_MIB = 1024 * 1024


# --------------------------------------------------------------------------
# Kernel
# --------------------------------------------------------------------------
def _multi_dropout_kernel(*args, seq_len: int, seq_pad: int, training: bool):
    if training:
        (hs_ref, smax_ref, savg_ref, wmax_ref, wavg_ref, b_ref,
         out_ref, max_acc, sum_acc) = args
    else:
        (hs_ref, wmax_ref, wavg_ref, b_ref,
         out_ref, max_acc, sum_acc) = args

    s = pl.program_id(1)
    ns = pl.num_programs(1)

    @pl.when(s == 0)
    def _init():
        max_acc[...] = jnp.full(max_acc.shape, -jnp.inf, dtype=max_acc.dtype)
        sum_acc[...] = jnp.zeros(sum_acc.shape, dtype=sum_acc.dtype)

    hs = hs_ref[...]                                     # (tile_b, tile_s, H)
    if seq_pad > 0:
        # Zero-padded rows exist at the end of the (padded) seq axis: mask them
        # out of both the max and the sum.  Pad < tile_s, so every tile keeps
        # at least one valid row.
        tile_s = hs.shape[1]
        row = jax.lax.broadcasted_iota(jnp.int32, hs.shape, 1) + s * tile_s
        valid = row < seq_len
        hs_f32 = hs.astype(jnp.float32)
        tile_max = jnp.max(jnp.where(valid, hs_f32, -jnp.inf), axis=1)
        tile_sum = jnp.sum(jnp.where(valid, hs_f32, 0.0), axis=1)
    else:
        tile_max = jnp.max(hs, axis=1).astype(jnp.float32)   # exact even in bf16
        tile_sum = jnp.sum(hs, axis=1, dtype=jnp.float32)    # f32 accumulation
    max_acc[...] = jnp.maximum(max_acc[...], tile_max)
    sum_acc[...] = sum_acc[...] + tile_sum

    @pl.when(s == ns - 1)
    def _finalize():
        xm = max_acc[...]                                 # (tile_b, H) f32
        xa = sum_acc[...] * (1.0 / seq_len)
        if training:
            # Combined dropout scale mean_p[keep_p / (1 - p)], precomputed in
            # the wrapper -> a single VPU multiply per pool half.
            xm = xm * smax_ref[...]
            xa = xa * savg_ref[...]
        # Single K-split matmul; LHS cast to the weight dtype so bf16 weights
        # take a single MXU pass (f32 accumulate either way).
        xm = xm.astype(wmax_ref.dtype)
        xa = xa.astype(wavg_ref.dtype)
        out = (jnp.dot(xm, wmax_ref[...], preferred_element_type=jnp.float32)
               + jnp.dot(xa, wavg_ref[...], preferred_element_type=jnp.float32)
               + b_ref[...])
        out_ref[...] = out.astype(out_ref.dtype)


# --------------------------------------------------------------------------
# Tiling / VMEM heuristics
# --------------------------------------------------------------------------
def _vmem_capacity_bytes():
    try:
        info = pltpu.get_tpu_info()
        cap = getattr(info, "vmem_capacity_bytes", None)
        if cap:
            return int(cap)
    except Exception:
        pass
    return 64 * _MIB  # conservative default (v7x per-TensorCore)


def _choose_tile_b(B):
    # Prefer an MXU-sized batch tile while keeping >= 2 (even) batch tiles so
    # the "parallel" axis shards across both TensorCores on v7x.
    for tb in (256, 128, 64, 32, 16, 8):
        if B % tb == 0 and (B // tb) >= 2 and (B // tb) % 2 == 0:
            return tb
    for tb in (256, 128, 64, 32, 16, 8):
        if B % tb == 0:
            return tb
    return B


def _choose_tile_s(S, tile_b, H, itemsize, block_budget_bytes):
    """Largest seq tile whose activation block stays inside the budget.
    Returns (tile_s, seq_pad); seq_pad > 0 when S must be zero-padded."""
    bytes_per_row = max(1, tile_b * H * itemsize)
    max_rows = max(8, block_budget_bytes // bytes_per_row)
    if S <= max_rows:
        return S, 0
    t = (max_rows // 8) * 8
    tt = t
    while tt >= 8:
        if S % tt == 0:
            return tt, 0
        tt -= 8
    return t, (-S) % t  # no aligned divisor: pad S (masked in-kernel)


def prepare_fc_params(weight, bias, hidden_size):
    """Split the (C, 2H) fc weight into max/avg K-halves, transpose, and
    zero-pad the class dim to a full 128-lane tile.  Hoist out of the hot path
    when calling the forward repeatedly."""
    C, two_h = weight.shape
    assert two_h == 2 * hidden_size
    c_pad = ((C + LANE - 1) // LANE) * LANE
    w = jnp.asarray(weight)
    w_max = jnp.zeros((hidden_size, c_pad), w.dtype).at[:, :C].set(
        w[:, :hidden_size].T)
    w_avg = jnp.zeros((hidden_size, c_pad), w.dtype).at[:, :C].set(
        w[:, hidden_size:].T)
    b_pad = jnp.zeros((1, c_pad), jnp.float32).at[0, :C].set(
        jnp.asarray(bias, jnp.float32))
    return w_max, w_avg, b_pad, C


# --------------------------------------------------------------------------
# Forward wrapper
# --------------------------------------------------------------------------
def multi_dropout_forward(hidden_states, weight=None, bias=None, *,
                          dropout_u=None, training=True, prepared=None,
                          tile_s=None):
    """hidden_states: (B, S, H); weight: (C, 2H); bias: (C,).
    dropout_u: (5, B, 2H) uniforms in [0,1) (required when training=True).
    Returns logits (B, C) in f32."""
    B, S, H = hidden_states.shape
    n_heads = len(DROPOUT_PS)
    if prepared is None:
        prepared = prepare_fc_params(weight, bias, H)
    w_max, w_avg, b_pad, C = prepared
    c_pad = w_max.shape[1]

    # --- dropout: fold the 5-head mask combine into two (B, H) scale arrays
    if training:
        assert dropout_u is not None and dropout_u.shape == (n_heads, B, 2 * H)
        u = dropout_u.astype(jnp.float32)
        ps = jnp.asarray(DROPOUT_PS, jnp.float32).reshape(n_heads, 1, 1)
        inv_keep = 1.0 / (1.0 - ps)
        scale = jnp.mean(jnp.where(u >= ps, inv_keep, 0.0), axis=0)  # (B, 2H)
        scale_max = scale[:, :H]
        scale_avg = scale[:, H:]

    # --- generation-aware tiling -------------------------------------------
    tile_b = _choose_tile_b(B)
    itemsize = jnp.dtype(hidden_states.dtype).itemsize
    w_itemsize = jnp.dtype(w_max.dtype).itemsize

    vmem_cap = _vmem_capacity_bytes()
    vmem_limit = min(int(vmem_cap * 0.72), 96 * _MIB)  # ~46 MiB on v7x, ~92 on v5e/v6e
    fixed = (2 * H * c_pad * w_itemsize      # w_max + w_avg (single-buffered)
             + c_pad * 4                     # bias
             + 2 * tile_b * c_pad * 4        # output (double-buffered)
             + 2 * tile_b * H * 4)           # max/sum accumulators
    if training:
        fixed += 2 * tile_b * H * 4          # combined dropout scales
    block_budget = min(max((vmem_limit - fixed) // 3, _MIB), 24 * _MIB)

    if tile_s is None:
        tile_s, seq_pad = _choose_tile_s(S, tile_b, H, itemsize, block_budget)
    else:
        seq_pad = (-S) % tile_s
    if seq_pad:
        hidden_states = jnp.pad(hidden_states,
                                ((0, 0), (0, seq_pad), (0, 0)))
    s_total = S + seq_pad
    assert s_total % tile_s == 0 and B % tile_b == 0
    nb, ns = B // tile_b, s_total // tile_s

    kernel = functools.partial(_multi_dropout_kernel, seq_len=S,
                               seq_pad=seq_pad, training=training)

    def _specs(use_buffered):
        # Constant / per-batch-tile operands don't need double buffering.
        const_kw = {"pipeline_mode": pl.Buffered(1)} if use_buffered else {}
        in_specs = [pl.BlockSpec((tile_b, tile_s, H), lambda b, s: (b, s, 0))]
        if training:
            in_specs += [
                pl.BlockSpec((tile_b, H), lambda b, s: (b, 0), **const_kw),
                pl.BlockSpec((tile_b, H), lambda b, s: (b, 0), **const_kw),
            ]
        in_specs += [
            pl.BlockSpec((H, c_pad), lambda b, s: (0, 0), **const_kw),
            pl.BlockSpec((H, c_pad), lambda b, s: (0, 0), **const_kw),
            pl.BlockSpec((1, c_pad), lambda b, s: (0, 0), **const_kw),
        ]
        out_spec = pl.BlockSpec((tile_b, c_pad), lambda b, s: (b, 0))
        return in_specs, out_spec

    operands = ((hidden_states, scale_max, scale_avg, w_max, w_avg, b_pad)
                if training else
                (hidden_states, w_max, w_avg, b_pad))

    out_pad = None
    for use_buffered in (True, False):
        in_specs, out_spec = _specs(use_buffered)
        try:
            out_pad = pl.pallas_call(
                kernel,
                out_shape=jax.ShapeDtypeStruct((B, c_pad), jnp.float32),
                grid=(nb, ns),
                in_specs=in_specs,
                out_specs=out_spec,
                scratch_shapes=[
                    pltpu.VMEM((tile_b, H), jnp.float32),   # running max
                    pltpu.VMEM((tile_b, H), jnp.float32),   # running f32 sum
                ],
                compiler_params=pltpu.CompilerParams(
                    dimension_semantics=("parallel", "arbitrary"),
                    vmem_limit_bytes=vmem_limit),
            )(*operands)
            break
        except Exception:
            if not use_buffered:
                raise   # fallback (default double-buffering) also failed

    return out_pad[:, :C]


# --------------------------------------------------------------------------
# Pure-JAX reference (uses the exact same uniforms as the kernel)
# --------------------------------------------------------------------------
def _reference(hidden_states, weight, bias, u, training):
    hs = hidden_states.astype(jnp.float32)
    max_pool = jnp.max(hs, axis=1)
    avg_pool = jnp.mean(hs, axis=1)
    pool = jnp.concatenate([max_pool, avg_pool], axis=-1)
    w = weight.astype(jnp.float32)
    b = bias.astype(jnp.float32)
    hi = jax.lax.Precision.HIGHEST
    if not training:
        return jnp.dot(pool, w.T, precision=hi) + b
    logits = []
    for i, p in enumerate(DROPOUT_PS):
        keep = (u[i] >= p).astype(jnp.float32)
        dropped = pool * keep * (1.0 / (1.0 - p))
        logits.append(jnp.dot(dropped, w.T, precision=hi) + b)
    return jnp.mean(jnp.stack(logits, axis=2), axis=2)


if __name__ == "__main__":
    # small shapes implied by the forward: hidden_states (B, S, H)
    B, S, H, C = 2, 16, 32, 4   # seq=16 with tile_s=8 exercises the grid loop

    key = jax.random.PRNGKey(0)
    k_x, k_w, k_b, k_u = jax.random.split(key, 4)

    hidden_states = jax.random.normal(k_x, (B, S, H), dtype=jnp.float32)
    weight = jax.random.normal(k_w, (C, 2 * H), dtype=jnp.float32) * 0.05
    bias = jax.random.normal(k_b, (C,), dtype=jnp.float32) * 0.05
    dropout_u = jax.random.uniform(k_u, (len(DROPOUT_PS), B, 2 * H),
                                   dtype=jnp.float32)

    # Tolerance note: the kernel matmul uses default MXU precision while the
    # reference uses Precision.HIGHEST, so allow bf16-pass-level error.
    TOL = dict(atol=2e-2, rtol=2e-2)

    # eval mode: dropout == identity, no dropout operands enter the kernel
    out_eval = jax.block_until_ready(
        multi_dropout_forward(hidden_states, weight, bias,
                              training=False, tile_s=8))
    ref_eval = _reference(hidden_states, weight, bias, dropout_u, False)
    assert out_eval.shape == (B, C)
    assert jnp.allclose(out_eval, ref_eval, **TOL), "eval-mode mismatch"

    # train mode: masks derived from the same uniforms -> directly comparable
    out_train = jax.block_until_ready(
        multi_dropout_forward(hidden_states, weight, bias,
                              dropout_u=dropout_u, training=True, tile_s=8))
    ref_train = _reference(hidden_states, weight, bias, dropout_u, True)
    assert out_train.shape == (B, C)
    assert jnp.all(jnp.isfinite(out_train))
    assert jnp.allclose(out_train, ref_train, **TOL), "train-mode mismatch"

    # ragged seq (S=13 not a multiple of tile_s=8) exercises the in-kernel
    # padding mask path added for robustness.
    hs_ragged = hidden_states[:, :13, :]
    out_rag = jax.block_until_ready(
        multi_dropout_forward(hs_ragged, weight, bias,
                              training=False, tile_s=8))
    ref_rag = _reference(hs_ragged, weight, bias, dropout_u, False)
    assert jnp.allclose(out_rag, ref_rag, **TOL), "ragged-seq mismatch"

    print("KERNEL_OK")
</pallas_src>

<mosaic_0001>
module attributes {stable_mosaic.version = 11 : i64} {
  func.func @_multi_dropout_kernel(%arg0: i32, %arg1: i32, %arg2: memref<2x8x32xf32, #tpu.memory_space<vmem>>, %arg3: memref<32x128xf32, #tpu.memory_space<vmem>>, %arg4: memref<32x128xf32, #tpu.memory_space<vmem>>, %arg5: memref<1x128xf32, #tpu.memory_space<vmem>>, %arg6: memref<2x128xf32, #tpu.memory_space<vmem>>, %arg7: memref<2x32xf32, #tpu.memory_space<vmem>>, %arg8: memref<2x32xf32, #tpu.memory_space<vmem>>) attributes {dimension_semantics = [#tpu.dimension_semantics<parallel>, #tpu.dimension_semantics<arbitrary>], iteration_bounds = array<i64: 1, 2>, scalar_prefetch = 0 : i64, scratch_operands = 2 : i64, tpu.core_type = #tpu.core_type<tc>, window_params = [{transform_indices = @transform_0, window_bounds = array<i64: 2, 8, 32>}, {pipeline_mode = #tpu.pipeline_mode<synchronous>, transform_indices = @transform_1, window_bounds = array<i64: 32, 128>}, {pipeline_mode = #tpu.pipeline_mode<synchronous>, transform_indices = @transform_2, window_bounds = array<i64: 32, 128>}, {pipeline_mode = #tpu.pipeline_mode<synchronous>, transform_indices = @transform_3, window_bounds = array<i64: 1, 128>}, {transform_indices = @transform_4, window_bounds = array<i64: 2, 128>}]} {
    %c0_i32 = arith.constant 0 : i32
    %0 = arith.cmpi eq, %arg1, %c0_i32 : i32
    %1 = arith.extui %0 : i1 to i32
    %c0_i32_0 = arith.constant 0 : i32
    %2 = arith.cmpi ne, %1, %c0_i32_0 : i32
    scf.if %2 {
      %cst_13 = arith.constant 0xFF800000 : f32
      %15 = vector.broadcast %cst_13 : f32 to vector<2x32xf32>
      %c0_14 = arith.constant 0 : index
      %c0_15 = arith.constant 0 : index
      %16 = vector.load %arg7[%c0_14, %c0_15] : memref<2x32xf32, #tpu.memory_space<vmem>>, vector<2x32xf32>
      tpu.vector_store %arg7[%c0_14, %c0_15], %15 {strides = array<i32>} : memref<2x32xf32, #tpu.memory_space<vmem>>, vector<2x32xf32>,
      %cst_16 = arith.constant 0.000000e+00 : f32
      %17 = vector.broadcast %cst_16 : f32 to vector<2x32xf32>
      %c0_17 = arith.constant 0 : index
      %c0_18 = arith.constant 0 : index
      %18 = vector.load %arg8[%c0_17, %c0_18] : memref<2x32xf32, #tpu.memory_space<vmem>>, vector<2x32xf32>
      tpu.vector_store %arg8[%c0_17, %c0_18], %17 {strides = array<i32>} : memref<2x32xf32, #tpu.memory_space<vmem>>, vector<2x32xf32>,
    } else {
    }
    %c0 = arith.constant 0 : index
    %c0_1 = arith.constant 0 : index
    %c0_2 = arith.constant 0 : index
    %3 = vector.load %arg2[%c0, %c0_1, %c0_2] : memref<2x8x32xf32, #tpu.memory_space<vmem>>, vector<2x8x32xf32>
    %cst = arith.constant dense<0xFF800000> : vector<2x32xf32>
    %4 = vector.multi_reduction <maximumf>, %3, %cst [1] : vector<2x8x32xf32> to vector<2x32xf32>
    %cst_3 = arith.constant dense<0.000000e+00> : vector<2x32xf32>
    %5 = vector.multi_reduction <add>, %3, %cst_3 [1] : vector<2x8x32xf32> to vector<2x32xf32>
    %c0_4 = arith.constant 0 : index
    %c0_5 = arith.constant 0 : index
    %6 = vector.load %arg7[%c0_4, %c0_5] : memref<2x32xf32, #tpu.memory_space<vmem>>, vector<2x32xf32>
    %7 = arith.maximumf %6, %4 : vector<2x32xf32>
    %c0_6 = arith.constant 0 : index
    %c0_7 = arith.constant 0 : index
    %8 = vector.load %arg7[%c0_6, %c0_7] : memref<2x32xf32, #tpu.memory_space<vmem>>, vector<2x32xf32>
    tpu.vector_store %arg7[%c0_6, %c0_7], %7 {strides = array<i32>} : memref<2x32xf32, #tpu.memory_space<vmem>>, vector<2x32xf32>,
    %c0_8 = arith.constant 0 : index
    %c0_9 = arith.constant 0 : index
    %9 = vector.load %arg8[%c0_8, %c0_9] : memref<2x32xf32, #tpu.memory_space<vmem>>, vector<2x32xf32>
    %10 = arith.addf %9, %5 : vector<2x32xf32>
    %c0_10 = arith.constant 0 : index
    %c0_11 = arith.constant 0 : index
    %11 = vector.load %arg8[%c0_10, %c0_11] : memref<2x32xf32, #tpu.memory_space<vmem>>, vector<2x32xf32>
    tpu.vector_store %arg8[%c0_10, %c0_11], %10 {strides = array<i32>} : memref<2x32xf32, #tpu.memory_space<vmem>>, vector<2x32xf32>,
    %c1_i32 = arith.constant 1 : i32
    %12 = arith.cmpi eq, %arg1, %c1_i32 : i32
    %13 = arith.extui %12 : i1 to i32
    %c0_i32_12 = arith.constant 0 : i32
    %14 = arith.cmpi ne, %13, %c0_i32_12 : i32
    scf.if %14 {
      %c0_13 = arith.constant 0 : index
      %c0_14 = arith.constant 0 : index
      %15 = vector.load %arg7[%c0_13, %c0_14] : memref<2x32xf32, #tpu.memory_space<vmem>>, vector<2x32xf32>
      %c0_15 = arith.constant 0 : index
      %c0_16 = arith.constant 0 : index
      %16 = vector.load %arg8[%c0_15, %c0_16] : memref<2x32xf32, #tpu.memory_space<vmem>>, vector<2x32xf32>
      %cst_17 = arith.constant 6.250000e-02 : f32
      %17 = vector.broadcast %cst_17 : f32 to vector<2x32xf32>
      %18 = arith.mulf %16, %17 : vector<2x32xf32>
      %c0_18 = arith.constant 0 : index
      %c0_19 = arith.constant 0 : index
      %19 = vector.load %arg3[%c0_18, %c0_19] : memref<32x128xf32, #tpu.memory_space<vmem>>, vector<32x128xf32>
      %cst_20 = arith.constant dense<0.000000e+00> : vector<2x128xf32>
      %20 = tpu.matmul %15, %19, %cst_20 {dimension_numbers = #tpu.dot_dimension_numbers<[1], [0], [0], [1], [0, 0, 1, 1], [], []>} : vector<2x32xf32>, vector<32x128xf32>, vector<2x128xf32> -> vector<2x128xf32>
      %c0_21 = arith.constant 0 : index
      %c0_22 = arith.constant 0 : index
      %21 = vector.load %arg4[%c0_21, %c0_22] : memref<32x128xf32, #tpu.memory_space<vmem>>, vector<32x128xf32>
      %cst_23 = arith.constant dense<0.000000e+00> : vector<2x128xf32>
      %22 = tpu.matmul %18, %21, %cst_23 {dimension_numbers = #tpu.dot_dimension_numbers<[1], [0], [0], [1], [0, 0, 1, 1], [], []>} : vector<2x32xf32>, vector<32x128xf32>, vector<2x128xf32> -> vector<2x128xf32>
      %23 = arith.addf %20, %22 : vector<2x128xf32>
      %c0_24 = arith.constant 0 : index
      %c0_25 = arith.constant 0 : index
      %24 = vector.load %arg5[%c0_24, %c0_25] : memref<1x128xf32, #tpu.memory_space<vmem>>, vector<1x128xf32>
      %25 = vector.broadcast %24 : vector<1x128xf32> to vector<2x128xf32>
      %26 = arith.addf %23, %25 : vector<2x128xf32>
      %c0_26 = arith.constant 0 : index
      %c0_27 = arith.constant 0 : index
      %27 = vector.load %arg6[%c0_26, %c0_27] : memref<2x128xf32, #tpu.memory_space<vmem>>, vector<2x128xf32>
      tpu.vector_store %arg6[%c0_26, %c0_27], %26 {strides = array<i32>} : memref<2x128xf32, #tpu.memory_space<vmem>>, vector<2x128xf32>,
    } else {
    }
    return
  }
  func.func @transform_0(%arg0: i32, %arg1: i32) -> (i32, i32, i32) {
    %c0_i32 = arith.constant 0 : i32
    %c0_i32_0 = arith.constant 0 : i32
    return %arg0, %arg1, %c0_i32 : i32, i32, i32
  }
  func.func @transform_1(%arg0: i32, %arg1: i32) -> (i32, i32) {
    %c0_i32 = arith.constant 0 : i32
    %c0_i32_0 = arith.constant 0 : i32
    %c0_i32_1 = arith.constant 0 : i32
    return %c0_i32, %c0_i32_0 : i32, i32
  }
  func.func @transform_2(%arg0: i32, %arg1: i32) -> (i32, i32) {
    %c0_i32 = arith.constant 0 : i32
    %c0_i32_0 = arith.constant 0 : i32
    %c0_i32_1 = arith.constant 0 : i32
    return %c0_i32, %c0_i32_0 : i32, i32
  }
  func.func @transform_3(%arg0: i32, %arg1: i32) -> (i32, i32) {
    %c0_i32 = arith.constant 0 : i32
    %c0_i32_0 = arith.constant 0 : i32
    %c0_i32_1 = arith.constant 0 : i32
    return %c0_i32, %c0_i32_0 : i32, i32
  }
  func.func @transform_4(%arg0: i32, %arg1: i32) -> (i32, i32) {
    %c0_i32 = arith.constant 0 : i32
    %c0_i32_0 = arith.constant 0 : i32
    return %arg0, %c0_i32 : i32, i32
  }
}

module attributes {stable_mosaic.version = 11 : i64} {
  func.func @_multi_dropout_kernel(%arg0: i32, %arg1: i32, %arg2: memref<2x8x32xf32, #tpu.memory_space<vmem>>, %arg3: memref<32x128xf32, #tpu.memory_space<vmem>>, %arg4: memref<32x128xf32, #tpu.memory_space<vmem>>, %arg5: memref<1x128xf32, #tpu.memory_space<vmem>>, %arg6: memref<2x128xf32, #tpu.memory_space<vmem>>, %arg7: memref<2x32xf32, #tpu.memory_space<vmem>>, %arg8: memref<2x32xf32, #tpu.memory_space<vmem>>) attributes {dimension_semantics = [#tpu.dimension_semantics<parallel>, #tpu.dimension_semantics<arbitrary>], iteration_bounds = array<i64: 1, 2>, scalar_prefetch = 0 : i64, scratch_operands = 2 : i64, tpu.core_type = #tpu.core_type<tc>, window_params = [{transform_indices = @transform_0, window_bounds = array<i64: 2, 8, 32>}, {pipeline_mode = #tpu.pipeline_mode<synchronous>, transform_indices = @transform_1, window_bounds = array<i64: 32, 128>}, {pipeline_mode = #tpu.pipeline_mode<synchronous>, transform_indices = @transform_2, window_bounds = array<i64: 32, 128>}, {pipeline_mode = #tpu.pipeline_mode<synchronous>, transform_indices = @transform_3, window_bounds = array<i64: 1, 128>}, {transform_indices = @transform_4, window_bounds = array<i64: 2, 128>}]} {
    %c0_i32 = arith.constant 0 : i32
    %0 = arith.cmpi eq, %arg1, %c0_i32 : i32
    %1 = arith.extui %0 : i1 to i32
    %c0_i32_0 = arith.constant 0 : i32
    %2 = arith.cmpi ne, %1, %c0_i32_0 : i32
    scf.if %2 {
      %cst_13 = arith.constant 0xFF800000 : f32
      %15 = vector.broadcast %cst_13 : f32 to vector<2x32xf32>
      %c0_14 = arith.constant 0 : index
      %c0_15 = arith.constant 0 : index
      %16 = vector.load %arg7[%c0_14, %c0_15] : memref<2x32xf32, #tpu.memory_space<vmem>>, vector<2x32xf32>
      tpu.vector_store %arg7[%c0_14, %c0_15], %15 {strides = array<i32>} : memref<2x32xf32, #tpu.memory_space<vmem>>, vector<2x32xf32>,
      %cst_16 = arith.constant 0.000000e+00 : f32
      %17 = vector.broadcast %cst_16 : f32 to vector<2x32xf32>
      %c0_17 = arith.constant 0 : index
      %c0_18 = arith.constant 0 : index
      %18 = vector.load %arg8[%c0_17, %c0_18] : memref<2x32xf32, #tpu.memory_space<vmem>>, vector<2x32xf32>
      tpu.vector_store %arg8[%c0_17, %c0_18], %17 {strides = array<i32>} : memref<2x32xf32, #tpu.memory_space<vmem>>, vector<2x32xf32>,
    } else {
    }
    %c0 = arith.constant 0 : index
    %c0_1 = arith.constant 0 : index
    %c0_2 = arith.constant 0 : index
    %3 = vector.load %arg2[%c0, %c0_1, %c0_2] : memref<2x8x32xf32, #tpu.memory_space<vmem>>, vector<2x8x32xf32>
    %cst = arith.constant dense<0xFF800000> : vector<2x32xf32>
    %4 = vector.multi_reduction <maximumf>, %3, %cst [1] : vector<2x8x32xf32> to vector<2x32xf32>
    %cst_3 = arith.constant dense<0.000000e+00> : vector<2x32xf32>
    %5 = vector.multi_reduction <add>, %3, %cst_3 [1] : vector<2x8x32xf32> to vector<2x32xf32>
    %c0_4 = arith.constant 0 : index
    %c0_5 = arith.constant 0 : index
    %6 = vector.load %arg7[%c0_4, %c0_5] : memref<2x32xf32, #tpu.memory_space<vmem>>, vector<2x32xf32>
    %7 = arith.maximumf %6, %4 : vector<2x32xf32>
    %c0_6 = arith.constant 0 : index
    %c0_7 = arith.constant 0 : index
    %8 = vector.load %arg7[%c0_6, %c0_7] : memref<2x32xf32, #tpu.memory_space<vmem>>, vector<2x32xf32>
    tpu.vector_store %arg7[%c0_6, %c0_7], %7 {strides = array<i32>} : memref<2x32xf32, #tpu.memory_space<vmem>>, vector<2x32xf32>,
    %c0_8 = arith.constant 0 : index
    %c0_9 = arith.constant 0 : index
    %9 = vector.load %arg8[%c0_8, %c0_9] : memref<2x32xf32, #tpu.memory_space<vmem>>, vector<2x32xf32>
    %10 = arith.addf %9, %5 : vector<2x32xf32>
    %c0_10 = arith.constant 0 : index
    %c0_11 = arith.constant 0 : index
    %11 = vector.load %arg8[%c0_10, %c0_11] : memref<2x32xf32, #tpu.memory_space<vmem>>, vector<2x32xf32>
    tpu.vector_store %arg8[%c0_10, %c0_11], %10 {strides = array<i32>} : memref<2x32xf32, #tpu.memory_space<vmem>>, vector<2x32xf32>,
    %c1_i32 = arith.constant 1 : i32
    %12 = arith.cmpi eq, %arg1, %c1_i32 : i32
    %13 = arith.extui %12 : i1 to i32
    %c0_i32_12 = arith.constant 0 : i32
    %14 = arith.cmpi ne, %13, %c0_i32_12 : i32
    scf.if %14 {
      %c0_13 = arith.constant 0 : index
      %c0_14 = arith.constant 0 : index
      %15 = vector.load %arg7[%c0_13, %c0_14] : memref<2x32xf32, #tpu.memory_space<vmem>>, vector<2x32xf32>
      %c0_15 = arith.constant 0 : index
      %c0_16 = arith.constant 0 : index
      %16 = vector.load %arg8[%c0_15, %c0_16] : memref<2x32xf32, #tpu.memory_space<vmem>>, vector<2x32xf32>
      %cst_17 = arith.constant 6.250000e-02 : f32
      %17 = vector.broadcast %cst_17 : f32 to vector<2x32xf32>
      %18 = arith.mulf %16, %17 : vector<2x32xf32>
      %c0_18 = arith.constant 0 : index
      %c0_19 = arith.constant 0 : index
      %19 = vector.load %arg3[%c0_18, %c0_19] : memref<32x128xf32, #tpu.memory_space<vmem>>, vector<32x128xf32>
      %cst_20 = arith.constant dense<0.000000e+00> : vector<2x128xf32>
      %20 = tpu.matmul %15, %19, %cst_20 {dimension_numbers = #tpu.dot_dimension_numbers<[1], [0], [0], [1], [0, 0, 1, 1], [], []>} : vector<2x32xf32>, vector<32x128xf32>, vector<2x128xf32> -> vector<2x128xf32>
      %c0_21 = arith.constant 0 : index
      %c0_22 = arith.constant 0 : index
      %21 = vector.load %arg4[%c0_21, %c0_22] : memref<32x128xf32, #tpu.memory_space<vmem>>, vector<32x128xf32>
      %cst_23 = arith.constant dense<0.000000e+00> : vector<2x128xf32>
      %22 = tpu.matmul %18, %21, %cst_23 {dimension_numbers = #tpu.dot_dimension_numbers<[1], [0], [0], [1], [0, 0, 1, 1], [], []>} : vector<2x32xf32>, vector<32x128xf32>, vector<2x128xf32> -> vector<2x128xf32>
      %23 = arith.addf %20, %22 : vector<2x128xf32>
      %c0_24 = arith.constant 0 : index
      %c0_25 = arith.constant 0 : index
      %24 = vector.load %arg5[%c0_24, %c0_25] : memref<1x128xf32, #tpu.memory_space<vmem>>, vector<1x128xf32>
      %25 = vector.broadcast %24 : vector<1x128xf32> to vector<2x128xf32>
      %26 = arith.addf %23, %25 : vector<2x128xf32>
      %c0_26 = arith.constant 0 : index
      %c0_27 = arith.constant 0 : index
      %27 = vector.load %arg6[%c0_26, %c0_27] : memref<2x128xf32, #tpu.memory_space<vmem>>, vector<2x128xf32>
      tpu.vector_store %arg6[%c0_26, %c0_27], %26 {strides = array<i32>} : memref<2x128xf32, #tpu.memory_space<vmem>>, vector<2x128xf32>,
    } else {
    }
    return
  }
  func.func @transform_0(%arg0: i32, %arg1: i32) -> (i32, i32, i32) {
    %c0_i32 = arith.constant 0 : i32
    %c0_i32_0 = arith.constant 0 : i32
    return %arg0, %arg1, %c0_i32 : i32, i32, i32
  }
  func.func @transform_1(%arg0: i32, %arg1: i32) -> (i32, i32) {
    %c0_i32 = arith.constant 0 : i32
    %c0_i32_0 = arith.constant 0 : i32
    %c0_i32_1 = arith.constant 0 : i32
    return %c0_i32, %c0_i32_0 : i32, i32
  }
  func.func @transform_2(%arg0: i32, %arg1: i32) -> (i32, i32) {
    %c0_i32 = arith.constant 0 : i32
    %c0_i32_0 = arith.constant 0 : i32
    %c0_i32_1 = arith.constant 0 : i32
    return %c0_i32, %c0_i32_0 : i32, i32
  }
  func.func @transform_3(%arg0: i32, %arg1: i32) -> (i32, i32) {
    %c0_i32 = arith.constant 0 : i32
    %c0_i32_0 = arith.constant 0 : i32
    %c0_i32_1 = arith.constant 0 : i32
    return %c0_i32, %c0_i32_0 : i32, i32
  }
  func.func @transform_4(%arg0: i32, %arg1: i32) -> (i32, i32) {
    %c0_i32 = arith.constant 0 : i32
    %c0_i32_0 = arith.constant 0 : i32
    return %arg0, %c0_i32 : i32, i32
  }
}

</mosaic_0001>

<llo_original>
// kernel: tpu_custom_call.1
$region0: #{tpu_custom_call.1}
  #allocation0 [shape = 'u32[]', space=smem, size = 0x4, offset = 0x4, fixed_abs, tag = 'smem constant byte address 0x4 - core index']
  #allocation1 [shape = 'u32[144,128]{1,0:T(1,128)}', space=vmem, size = 0x12000, scoped, tag = 'internal scratch']
  #allocation2 [shape = 'f32[2,32]{1,0:T(2,128)}', space=vmem, size = 0x400, scoped, tag = 'scratch operand']
  #allocation3 [shape = 'f32[2,32]{1,0:T(2,128)}', space=vmem, size = 0x400, scoped, tag = 'scratch operand']
  %s0 = inlined_call_operand.hbm [shape: f32[2,16,32], index: 0, kind: input, shape index: {}]
  %s1 = inlined_call_operand.hbm [shape: f32[32,128], index: 1, kind: input, shape index: {}]
  %s2 = inlined_call_operand.hbm [shape: f32[32,128], index: 2, kind: input, shape index: {}]
  %s3 = inlined_call_operand.vmem [shape: f32[1,128], index: 3, kind: input, shape index: {}]
  %s4 = inlined_call_operand.hbm [shape: f32[2,128], index: 4, kind: output, shape index: {}]
  %s5 = sld [smem:[#allocation0]]
  $region69: #{tpu_custom_call.1} parent=0
    _
  %s7 = ssub.s32 1, %s5
  %s8 = scalar_select 0, %s7, %s5
  $region1: #{tpu_custom_call.1} parent=0
    #allocation4 [shape = 'u8[16384]{0}', space=vmem, size = 0x4000, scoped, tag = 'input window, operand 0']
    #allocation5 [shape = 's32[2]{0}', space=sflag, size = 0x8, scoped, tag = 'scoped memory for tpu_custom_call.1']
    #allocation6 [shape = 's32[2]{0}', space=sflag, size = 0x8, scoped, tag = 'scoped memory for tpu_custom_call.1']
    #allocation7 [shape = 'u8[16384]{0}', space=vmem, size = 0x4000, scoped, tag = 'input window, operand 1, single buffered']
    #allocation8 [shape = 's32[1]{0}', space=sflag, size = 0x4, scoped, tag = 'scoped memory for tpu_custom_call.1']
    #allocation9 [shape = 'u8[16384]{0}', space=vmem, size = 0x4000, scoped, tag = 'input window, operand 2, single buffered']
    #allocation10 [shape = 'u8[1024]{0}', space=vmem, size = 0x400, scoped, tag = 'output window, operand 0, single buffered']
    %9 = vsyncpa [#allocation5], 0
    %s10 = scalar_lea.sflag [#allocation5], 1
    %11 = vsyncpa %s10, 0
    %12 = vsyncpa [#allocation8], 0
    %13 = vsyncpa [#allocation6], 0
    loop: start=0, step=1, limit=4
    $region2: #{tpu_custom_call.1} parent=1 // loop_pre_header
      _
    $region3: #{tpu_custom_call.1} parent=1 // loop_header
      %s15 = sphi 0, %s19
      %p16 = scmp.ge.s32.totalorder %s15, 4
      %s22 = sphi 0, %s34
      %s23 = sphi 0, %s30
      %s24 = sphi 0, %s22
      %s25 = sphi 0, %s23
      %s26 = sphi 0, %s24
      %s27 = sphi 0, %s25
      %s39 = sphi 0, %s41
      %s42 = sphi 0, %s39
      %s43 = sphi 0, %s42
      %s59 = sphi 0, %s43
      %s63 = sphi 0, %s63
      %s65 = sphi 0, %s63
      %s66 = sphi 0, %s65
      %s80 = sphi 0, %s66
      %s84 = sphi 0, %s84
      %s86 = sphi 0, %s84
      %s87 = sphi 0, %s86
      %s101 = sphi 0, %s87
      %s105 = sphi 0, %s105
      %s107 = sphi 0, %s105
      %s108 = sphi 0, %s107
      %s122 = sphi 0, %s108
      %s128 = sphi 0, %s130
      %s131 = sphi 0, %s128
      %s132 = sphi 0, %s131
      %s148 = sphi 0, %s132
    $region4: #{tpu_custom_call.1} parent=1 // loop_header_branch
      %18 = sbr.rel (%p16) target = $region8
    $region5: #{tpu_custom_call.1} parent=1 // loop_body
      %s20 = ssub.s32 %s15, 1
      %s21 = ssub.s32 %s15, 2
      %s28 = sadd.s32 1, %s23
      %p29 = scmp.ge.s32.totalorder %s28, 2
      %s30 = scalar_select %p29, 0, %s28
      %s31 = sadd.s32 1, %s22
      %s32 = scalar_select %p29, %s31, %s22
      %p33 = scmp.ge.s32.totalorder %s32, 1
      %s34 = scalar_select %p33, 0, %s32
      %s35 = ssub.s32 %s22, %s34
      %s36 = ssub.s32 %s23, %s30
      %s37 = sor.u32 %s35, %s36
      %p38 = scmp.eq.s32.totalorder %s37, 0
      %s40 = sadd.s32 %s39, 1
      %s41 = scalar_select %p38, %s39, %s40
      %p44 = pneg %p38
      %p45 = scmp.eq.s32.totalorder %s15, 1
      %p46 = por %p44, %p45
      %p47 = scmp.ne.s32.totalorder %s39, %s42
      %p48 = scmp.eq.s32.totalorder %s15, 0
      %p49 = por %p47, %p48
      %p50 = scmp.ne.s32.totalorder %s39, %s42
      %p51 = scmp.eq.s32.totalorder %s20, 1
      %p52 = por %p50, %p51
      %p53 = scmp.ne.s32.totalorder %s42, %s43
      %p54 = scmp.eq.s32.totalorder %s20, 0
      %p55 = por %p53, %p54
      %p56 = scmp.ne.s32.totalorder %s42, %s43
      %p57 = scmp.eq.s32.totalorder %s21, 1
      %p58 = por %p56, %p57
      %p60 = scmp.ne.s32.totalorder %s43, %s59
      %p61 = scmp.eq.s32.totalorder %s21, 0
      %p62 = por %p60, %p61
      %s64 = sadd.s32 %s63, 1
      %p67 = scmp.eq.s32.totalorder %s15, 1
      %p68 = scmp.ne.s32.totalorder %s63, %s65
      %p69 = scmp.eq.s32.totalorder %s15, 0
      %p70 = por %p68, %p69
      %p71 = scmp.ne.s32.totalorder %s63, %s65
      %p72 = scmp.eq.s32.totalorder %s20, 1
      %p73 = por %p71, %p72
      %p74 = scmp.ne.s32.totalorder %s65, %s66
      %p75 = scmp.eq.s32.totalorder %s20, 0
      %p76 = por %p74, %p75
      %p77 = scmp.ne.s32.totalorder %s65, %s66
      %p78 = scmp.eq.s32.totalorder %s21, 1
      %p79 = por %p77, %p78
      %p81 = scmp.ne.s32.totalorder %s66, %s80
      %p82 = scmp.eq.s32.totalorder %s21, 0
      %p83 = por %p81, %p82
      %s85 = sadd.s32 %s84, 1
      %p88 = scmp.eq.s32.totalorder %s15, 1
      %p89 = scmp.ne.s32.totalorder %s84, %s86
      %p90 = scmp.eq.s32.totalorder %s15, 0
      %p91 = por %p89, %p90
      %p92 = scmp.ne.s32.totalorder %s84, %s86
      %p93 = scmp.eq.s32.totalorder %s20, 1
      %p94 = por %p92, %p93
      %p95 = scmp.ne.s32.totalorder %s86, %s87
      %p96 = scmp.eq.s32.totalorder %s20, 0
      %p97 = por %p95, %p96
      %p98 = scmp.ne.s32.totalorder %s86, %s87
      %p99 = scmp.eq.s32.totalorder %s21, 1
      %p100 = por %p98, %p99
      %p102 = scmp.ne.s32.totalorder %s87, %s101
      %p103 = scmp.eq.s32.totalorder %s21, 0
      %p104 = por %p102, %p103
      %s106 = sadd.s32 %s105, 1
      %p109 = scmp.eq.s32.totalorder %s15, 1
      %p110 = scmp.ne.s32.totalorder %s105, %s107
      %p111 = scmp.eq.s32.totalorder %s15, 0
      %p112 = por %p110, %p111
      %p113 = scmp.ne.s32.totalorder %s105, %s107
      %p114 = scmp.eq.s32.totalorder %s20, 1
      %p115 = por %p113, %p114
      %p116 = scmp.ne.s32.totalorder %s107, %s108
      %p117 = scmp.eq.s32.totalorder %s20, 0
      %p118 = por %p116, %p117
      %p119 = scmp.ne.s32.totalorder %s107, %s108
      %p120 = scmp.eq.s32.totalorder %s21, 1
      %p121 = por %p119, %p120
      %p123 = scmp.ne.s32.totalorder %s108, %s122
      %p124 = scmp.eq.s32.totalorder %s21, 0
      %p125 = por %p123, %p124
      %s126 = ssub.s32 %s22, %s34
      %p127 = scmp.eq.s32.totalorder %s126, 0
      %s129 = sadd.s32 %s128, 1
      %s130 = scalar_select %p127, %s128, %s129
      %p133 = pneg %p127
      %p134 = scmp.eq.s32.totalorder %s15, 1
      %p135 = por %p133, %p134
      %p136 = scmp.ne.s32.totalorder %s128, %s131
      %p137 = scmp.eq.s32.totalorder %s15, 0
      %p138 = por %p136, %p137
      %p139 = scmp.ne.s32.totalorder %s128, %s131
      %p140 = scmp.eq.s32.totalorder %s20, 1
      %p141 = por %p139, %p140
      %p142 = scmp.ne.s32.totalorder %s131, %s132
      %p143 = scmp.eq.s32.totalorder %s20, 0
      %p144 = por %p142, %p143
      %p145 = scmp.ne.s32.totalorder %s131, %s132
      %p146 = scmp.eq.s32.totalorder %s21, 1
      %p147 = por %p145, %p146
      %p149 = scmp.ne.s32.totalorder %s132, %s148
      %p150 = scmp.eq.s32.totalorder %s21, 0
      %p151 = por %p149, %p150
      %p152 = scmp.le.s32.totalorder 1, %s15
      %p153 = scmp.lt.s32.totalorder %s15, 3
      %p154 = pnand %p152, %p153
      %p155 = pneg %p154
      // Predicated region
      $region9: #{tpu_custom_call.1} parent=5 // pred_check
        _
      $region10: #{tpu_custom_call.1} parent=5 // pred_check_branch
        %157 = sbr.rel (%p154) target = $region12
      $region11: #{tpu_custom_call.1} parent=5 // pred_region
        %s158 = ssub.s32 %s15, 1
        // Predicated region
        $region13: #{tpu_custom_call.1} parent=11 // pred_check
          %p159 = pneg %p76
        $region14: #{tpu_custom_call.1} parent=11 // pred_check_branch
          %161 = sbr.rel (%p159) target = $region16
        $region15: #{tpu_custom_call.1} parent=11 // pred_region
          %s163 = ssub.s32 512, 512
          %164 = vsyncadd [#allocation8], %s163
          %s165 = sshll.u32 [#allocation7], 4
          %s166 = int_to_ptr.vmem [resolvable:$true] %s165
          %171 = dma.hbm_to_vmem [thread:$0]  %s1, 512, %s166, [#allocation8], 128, 128, 8
        $region16: #{tpu_custom_call.1} parent=11 // pred_fallthru
          _
        // Predicated region
        $region17: #{tpu_custom_call.1} parent=11 // pred_check
          %p172 = pneg %p97
        $region18: #{tpu_custom_call.1} parent=11 // pred_check_branch
          %174 = sbr.rel (%p172) target = $region20
        $region19: #{tpu_custom_call.1} parent=11 // pred_region
          %s176 = ssub.s32 512, 512
          %177 = vsyncadd [#allocation8], %s176
          %s178 = sshll.u32 [#allocation9], 4
          %s179 = int_to_ptr.vmem [resolvable:$true] %s178
          %184 = dma.hbm_to_vmem [thread:$0]  %s2, 512, %s179, [#allocation8], 128, 128, 8
        $region20: #{tpu_custom_call.1} parent=11 // pred_fallthru
          _
        // Predicated region
        $region21: #{tpu_custom_call.1} parent=11 // pred_check
          %p185 = pneg %p118
        $region22: #{tpu_custom_call.1} parent=11 // pred_check_branch
          %187 = sbr.rel (%p185) target = $region24
        $region23: #{tpu_custom_call.1} parent=11 // pred_region
          _
        $region24: #{tpu_custom_call.1} parent=11 // pred_fallthru
          _
      $region12: #{tpu_custom_call.1} parent=5 // pred_fallthru
        _
      %p188 = scmp.lt.s32.totalorder %s15, 2
      // Predicated region
      $region25: #{tpu_custom_call.1} parent=5 // pred_check
        %p189 = pneg %p188
      $region26: #{tpu_custom_call.1} parent=5 // pred_check_branch
        %191 = sbr.rel (%p189) target = $region28
      $region27: #{tpu_custom_call.1} parent=5 // pred_region
        // Predicated region
        $region29: #{tpu_custom_call.1} parent=27 // pred_check
          %p192 = pneg %p49
        $region30: #{tpu_custom_call.1} parent=27 // pred_check_branch
          %194 = sbr.rel (%p192) target = $region32
        $region31: #{tpu_custom_call.1} parent=27 // pred_region
          %s195 = sand.u32 %s39, 1
          %s196 = scalar_lea.sflag [#allocation5], %s195
          %s197 = sand.u32 %s39, 1
          %s198 = smul.addr %s197, 16
          %s199 = scalar_lea.vmem [#allocation4], %s198
          %s200 = smul.u32 2, %s22
          %s202 = ssub.s32 256, 256
          %203 = vsyncadd %s196, %s202
          %s204 = smul.addr %s200, 2
          %s205 = sadd.s32 %s23, %s204
          %s206 = smul.addr %s205, 128
          %s207 = scalar_lea.hbm %s0, %s206
          %s208 = sshll.u32 %s199, 4
          %s209 = int_to_ptr.vmem [resolvable:$true] %s208
          %214 = dma.hbm_to_vmem [thread:$0]  %s207, 256, %s209, %s196, 256, 128, 8
        $region32: #{tpu_custom_call.1} parent=27 // pred_fallthru
          _
      $region28: #{tpu_custom_call.1} parent=5 // pred_fallthru
        _
      %p215 = scmp.le.s32.totalorder 1, %s15
      %p216 = scmp.lt.s32.totalorder %s15, 3
      %p217 = pnand %p215, %p216
      %p218 = pneg %p217
      // Predicated region
      $region33: #{tpu_custom_call.1} parent=5 // pred_check
        _
      $region34: #{tpu_custom_call.1} parent=5 // pred_check_branch
        %220 = sbr.rel (%p217) target = $region36
      $region35: #{tpu_custom_call.1} parent=5 // pred_region
        %s221 = ssub.s32 %s15, 1
        %s222 = sand.u32 %s42, 1
        %s223 = scalar_lea.sflag [#allocation5], %s222
        %s224 = sand.u32 %s42, 1
        %s225 = smul.addr %s224, 16
        %s226 = scalar_lea.vmem [#allocation4], %s225
        // Predicated region
        $region37: #{tpu_custom_call.1} parent=35 // pred_check
          %p227 = pneg %p55
        $region38: #{tpu_custom_call.1} parent=35 // pred_check_branch
          %229 = sbr.rel (%p227) target = $region40
        $region39: #{tpu_custom_call.1} parent=35 // pred_region
          %230 = dma.done %s223, 256
        $region40: #{tpu_custom_call.1} parent=35 // pred_fallthru
          _
        // Predicated region
        $region41: #{tpu_custom_call.1} parent=35 // pred_check
          %p231 = pneg %p76
        $region42: #{tpu_custom_call.1} parent=35 // pred_check_branch
          %233 = sbr.rel (%p231) target = $region44
        $region43: #{tpu_custom_call.1} parent=35 // pred_region
          %234 = dma.done [#allocation8], 512
        $region44: #{tpu_custom_call.1} parent=35 // pred_fallthru
          _
        // Predicated region
        $region45: #{tpu_custom_call.1} parent=35 // pred_check
          %p235 = pneg %p97
        $region46: #{tpu_custom_call.1} parent=35 // pred_check_branch
          %237 = sbr.rel (%p235) target = $region48
        $region47: #{tpu_custom_call.1} parent=35 // pred_region
          %238 = dma.done [#allocation8], 512
        $region48: #{tpu_custom_call.1} parent=35 // pred_fallthru
          _
        %s239 = sand.u32 %s42, 1
        %s240 = scalar_lea.sflag [#allocation5], %s239
        %s241 = sand.u32 %s42, 1
        %s242 = smul.addr %s241, 16
        %s243 = scalar_lea.vmem [#allocation4], %s242
        %p244 = pneg %p55
        %p245 = pneg %p52
        %p246 = pneg %p76
        %p247 = pneg %p73
        %p248 = pneg %p97
        %p249 = pneg %p94
        %p250 = pneg %p118
        %p251 = pneg %p115
        %p252 = pneg %p144
        %p253 = pneg %p141
        %s254 = smul.u32 2, %s24
        %p255 = scmp.eq.s32.totalorder %s25, 0
        // Predicated region
        $region49: #{tpu_custom_call.1} parent=35 // pred_check
          %p256 = pneg %p255
        $region50: #{tpu_custom_call.1} parent=35 // pred_check_branch
          %258 = sbr.rel (%p256) target = $region52
        $region51: #{tpu_custom_call.1} parent=35 // pred_region
          %vm259 = vcmask 254976
          %260 = vst.msk [vmem:[#allocation2] sm:$0x3] %vm259, -inf
          %261 = vst.msk [vmem:[#allocation3] sm:$0x3] %vm259, 0.0
        $region52: #{tpu_custom_call.1} parent=35 // pred_fallthru
          _
        %v262 = vld [vmem:[%s226] sm:$0xff]
        %v263 = vld [vmem:[%s226 + $0x8] sm:$0xff]
        %vm264 = vcmask 261120
        %v265 = vsel %vm264, %v262, -inf
        %v266 = vrot.slane %v265, 4
        %v267 = vmax.f32 %v265, %v266
        %v268 = vrot.slane %v267, 2
        %v269 = vmax.f32 %v267, %v268
        %v270 = vrot.slane %v269, 1
        %v271 = vmax.f32 %v269, %v270
        %v272 = vsel %vm264, %v263, -inf
        %v273 = vrot.slane %v272, 4
        %v274 = vmax.f32 %v272, %v273
        %v275 = vrot.slane %v274, 2
        %v276 = vmax.f32 %v274, %v275
        %v277 = vrot.slane %v276, 1
        %v278 = vmax.f32 %v276, %v277
        %v279 = vsel %vm264, %v262, 0.0
        %v280 = vrot.slane %v279, 4
        %v281 = vadd.f32 %v279, %v280
        %v282 = vrot.slane %v281, 2
        %v283 = vadd.f32 %v281, %v282
        %v284 = vrot.slane %v283, 1
        %v285 = vadd.f32 %v283, %v284
        %v286 = vsel %vm264, %v263, 0.0
        %v287 = vrot.slane %v286, 4
        %v288 = vadd.f32 %v286, %v287
        %v289 = vrot.slane %v288, 2
        %v290 = vadd.f32 %v288, %v289
        %v291 = vrot.slane %v290, 1
        %v292 = vadd.f32 %v290, %v291
        %v293 = vld [vmem:[#allocation2] sm:$0x3]
        %vm296 = vcmask 1041409
        %v297 = vsel %vm296, %v278, %v271
        %v299 = vmax.f32 %v293, %v297
        %vm300 = vcmask 254976
        %301 = vst.msk [vmem:[#allocation2] sm:$0x3] %vm300, %v299
        %v302 = vld [vmem:[#allocation3] sm:$0x3]
        %v305 = vsel %vm296, %v292, %v285
        %v307 = vadd.f32 %v302, %v305
        %308 = vst.msk [vmem:[#allocation3] sm:$0x3] %vm300, %v307
        %p309 = scmp.eq.s32.totalorder %s25, 1
        // Predicated region
        $region53: #{tpu_custom_call.1} parent=35 // pred_check
          %p310 = pneg %p309
        $region54: #{tpu_custom_call.1} parent=35 // pred_check_branch
          %312 = sbr.rel (%p310) target = $region56
        $region55: #{tpu_custom_call.1} parent=35 // pred_region
          %v313 = vld [vmem:[#allocation2] sm:$0x3]
          %v314 = vld [vmem:[#allocation3] sm:$0x3]
          %v315 = vmul.f32 %v314, 0.0625
          %v316 = vld [vmem:[#allocation7] sm:$0xff]
          %v317 = vld [vmem:[#allocation7 + $0x8] sm:$0xff]
          %v318 = vld [vmem:[#allocation7 + $0x10] sm:$0xff]
          %v319 = vld [vmem:[#allocation7 + $0x18] sm:$0xff]
          %v320 = vld [vmem:[#allocation9] sm:$0xff]
          %v321 = vld [vmem:[#allocation9 + $0x8] sm:$0xff]
          %v322 = vld [vmem:[#allocation9 + $0x10] sm:$0xff]
          %v323 = vld [vmem:[#allocation9 + $0x18] sm:$0xff]
          %v325 = vsel %vm264, %v315, 0
          %327 = vmatprep.subr.mxu0 0.0
          %328 = vmatpush1.msra.mxu0 %v320
          %329 = vmatprep.subr.mxu0 0.0
          %330 = vmatpush1.msra.mxu0 %v321
          %331 = vmatprep.subr.mxu0 0.0
          %332 = vmatpush1.msra.mxu0 %v322
          %333 = vmatprep.subr.mxu0 0.0
          %334 = vmatpush1.msra.mxu0 %v323
          %335 = vmatprep.subr.mxu0 0.0
          %336 = vmatpush1.msra.mxu0 0.0
          %337 = vmatprep.subr.mxu0 0.0
          %338 = vmatpush1.msra.mxu0 0.0
          %339 = vmatprep.subr.mxu0 0.0
          %340 = vmatpush1.msra.mxu0 0.0
          %341 = vmatprep.subr.mxu0 0.0
          %342 = vmatpush1.msra.mxu0 0.0
          %343 = vmatprep.subr.mxu0 0.0
          %344 = vmatpush1.msra.mxu0 0.0
          %345 = vmatprep.subr.mxu0 0.0
          %346 = vmatpush1.msra.mxu0 0.0
          %347 = vmatprep.subr.mxu0 0.0
          %348 = vmatpush1.msra.mxu0 0.0
          %349 = vmatprep.subr.mxu0 0.0
          %350 = vmatpush1.msra.mxu0 0.0
          %351 = vmatprep.subr.mxu0 0.0
          %352 = vmatpush1.msra.mxu0 0.0
          %353 = vmatprep.subr.mxu0 0.0
          %354 = vmatpush1.msra.mxu0 0.0
          %355 = vmatprep.subr.mxu0 0.0
          %356 = vmatpush1.msra.mxu0 0.0
          %357 = vmatprep.subr.mxu0 0.0
          %358 = vmatpush1.msra.mxu0 0.0
          %359 = vmatprep.subr.mxu0 0.0
          %360 = vmatpush1.msra.mxu0 0.0
          %361 = vmatprep.subr.mxu0 0.0
          %362 = vmatpush1.msra.mxu0 0.0
          %363 = vmatprep.subr.mxu0 0.0
          %364 = vmatpush1.msra.mxu0 0.0
          %365 = vmatprep.subr.mxu0 0.0
          %366 = vmatpush1.msra.mxu0 0.0
          %367 = vmatprep.subr.mxu0 0.0
          %368 = vmatpush1.msra.mxu0 0.0
          %369 = vmatprep.subr.mxu0 0.0
          %370 = vmatpush1.msra.mxu0 0.0
          %371 = vmatprep.subr.mxu0 0.0
          %372 = vmatpush1.msra.mxu0 0.0
          %373 = vmatprep.subr.mxu0 0.0
          %374 = vmatpush1.msra.mxu0 0.0
          %375 = vmatprep.subr.mxu0 0.0
          %376 = vmatpush1.msra.mxu0 0.0
          %377 = vmatprep.subr.mxu0 0.0
          %378 = vmatpush1.msra.mxu0 0.0
          %379 = vmatprep.subr.mxu0 0.0
          %380 = vmatpush1.msra.mxu0 0.0
          %381 = vmatprep.subr.mxu0 0.0
          %382 = vmatpush1.msra.mxu0 0.0
          %383 = vmatprep.subr.mxu0 0.0
          %384 = vmatpush1.msra.mxu0 0.0
          %385 = vmatprep.subr.mxu0 0.0
          %386 = vmatpush1.msra.mxu0 0.0
          %387 = vmatprep.subr.mxu0 0.0
          %388 = vmatpush1.msra.mxu0 0.0
          %389 = vmatprep.subr.mxu0 0.0
          %390 = vmatpush1.msra.mxu0 0.0
          %391 = vmatprep.mubr.f32.mxu0 0.0
          %392 = vmatmul.mubr.f32.gmra.mrb[0].mxu0 %v325
          %v393 = vpop.f32.mrb[0].mxu0
          %v394 = vadd.f32 0.0, %v393
          %v395 = vpop.f32.mrb[0].mxu0
          %396 = vdwg.mxu0
          %v398 = vsel %vm264, %v313, 0
          %400 = vmatprep.subr.mxu0 0.0
          %401 = vmatpush1.msra.mxu0 %v316
          %402 = vmatprep.subr.mxu0 0.0
          %403 = vmatpush1.msra.mxu0 %v317
          %404 = vmatprep.subr.mxu0 0.0
          %405 = vmatpush1.msra.mxu0 %v318
          %406 = vmatprep.subr.mxu0 0.0
          %407 = vmatpush1.msra.mxu0 %v319
          %408 = vmatprep.subr.mxu0 0.0
          %409 = vmatpush1.msra.mxu0 0.0
          %410 = vmatprep.subr.mxu0 0.0
          %411 = vmatpush1.msra.mxu0 0.0
          %412 = vmatprep.subr.mxu0 0.0
          %413 = vmatpush1.msra.mxu0 0.0
          %414 = vmatprep.subr.mxu0 0.0
          %415 = vmatpush1.msra.mxu0 0.0
          %416 = vmatprep.subr.mxu0 0.0
          %417 = vmatpush1.msra.mxu0 0.0
          %418 = vmatprep.subr.mxu0 0.0
          %419 = vmatpush1.msra.mxu0 0.0
          %420 = vmatprep.subr.mxu0 0.0
          %421 = vmatpush1.msra.mxu0 0.0
          %422 = vmatprep.subr.mxu0 0.0
          %423 = vmatpush1.msra.mxu0 0.0
          %424 = vmatprep.subr.mxu0 0.0
          %425 = vmatpush1.msra.mxu0 0.0
          %426 = vmatprep.subr.mxu0 0.0
          %427 = vmatpush1.msra.mxu0 0.0
          %428 = vmatprep.subr.mxu0 0.0
          %429 = vmatpush1.msra.mxu0 0.0
          %430 = vmatprep.subr.mxu0 0.0
          %431 = vmatpush1.msra.mxu0 0.0
          %432 = vmatprep.subr.mxu0 0.0
          %433 = vmatpush1.msra.mxu0 0.0
          %434 = vmatprep.subr.mxu0 0.0
          %435 = vmatpush1.msra.mxu0 0.0
          %436 = vmatprep.subr.mxu0 0.0
          %437 = vmatpush1.msra.mxu0 0.0
          %438 = vmatprep.subr.mxu0 0.0
          %439 = vmatpush1.msra.mxu0 0.0
          %440 = vmatprep.subr.mxu0 0.0
          %441 = vmatpush1.msra.mxu0 0.0
          %442 = vmatprep.subr.mxu0 0.0
          %443 = vmatpush1.msra.mxu0 0.0
          %444 = vmatprep.subr.mxu0 0.0
          %445 = vmatpush1.msra.mxu0 0.0
          %446 = vmatprep.subr.mxu0 0.0
          %447 = vmatpush1.msra.mxu0 0.0
          %448 = vmatprep.subr.mxu0 0.0
          %449 = vmatpush1.msra.mxu0 0.0
          %450 = vmatprep.subr.mxu0 0.0
          %451 = vmatpush1.msra.mxu0 0.0
          %452 = vmatprep.subr.mxu0 0.0
          %453 = vmatpush1.msra.mxu0 0.0
          %454 = vmatprep.subr.mxu0 0.0
          %455 = vmatpush1.msra.mxu0 0.0
          %456 = vmatprep.subr.mxu0 0.0
          %457 = vmatpush1.msra.mxu0 0.0
          %458 = vmatprep.subr.mxu0 0.0
          %459 = vmatpush1.msra.mxu0 0.0
          %460 = vmatprep.subr.mxu0 0.0
          %461 = vmatpush1.msra.mxu0 0.0
          %462 = vmatprep.subr.mxu0 0.0
          %463 = vmatpush1.msra.mxu0 0.0
          %464 = vmatprep.mubr.f32.mxu0 0.0
          %465 = vmatmul.mubr.f32.gmra.mrb[0].mxu0 %v398
          %v466 = vpop.f32.mrb[0].mxu0
          %v467 = vadd.f32 %v394, %v466
          %v468 = vpop.f32.mrb[0].mxu0
          %469 = vdwg.mxu0
          %v470 = vld [vmem:[%s3] sm:$0x1]
          %v472 = vlaneseq
          %v473 = vshrl.u32 %v472, 7
          %v474 = vsub.s32 0, %v473
          %v475 = vrot.slane %v470, %v474
          %v477 = vadd.f32 %v467, %v475
          %478 = vst [vmem:[#allocation10] sm:$0x3] %v477
        $region56: #{tpu_custom_call.1} parent=35 // pred_fallthru
          _
        // Predicated region
        $region57: #{tpu_custom_call.1} parent=35 // pred_check
          %p479 = pneg %p141
        $region58: #{tpu_custom_call.1} parent=35 // pred_check_branch
          %481 = sbr.rel (%p479) target = $region60
        $region59: #{tpu_custom_call.1} parent=35 // pred_region
          %s483 = ssub.s32 32, 32
          %484 = vsyncadd [#allocation6], %s483
          %s485 = smul.addr %s24, 32
          %s486 = scalar_lea.hbm %s4, %s485
          %s488 = sshll.u32 [#allocation10], 4
          %s489 = int_to_ptr.vmem [resolvable:$true] %s488
          %491 = dma.vmem_to_hbm [thread:$0]  %s489, 32, %s486, [#allocation6]
        $region60: #{tpu_custom_call.1} parent=35 // pred_fallthru
          _
        // Predicated region
        $region61: #{tpu_custom_call.1} parent=35 // pred_check
          %p492 = pneg %p141
        $region62: #{tpu_custom_call.1} parent=35 // pred_check_branch
          %494 = sbr.rel (%p492) target = $region64
        $region63: #{tpu_custom_call.1} parent=35 // pred_region
          %495 = dma.done [#allocation6], 32
        $region64: #{tpu_custom_call.1} parent=35 // pred_fallthru
          _
      $region36: #{tpu_custom_call.1} parent=5 // pred_fallthru
        _
      %p496 = scmp.le.s32.totalorder 2, %s15
      // Predicated region
      $region65: #{tpu_custom_call.1} parent=5 // pred_check
        %p497 = pneg %p496
      $region66: #{tpu_custom_call.1} parent=5 // pred_check_branch
        %499 = sbr.rel (%p497) target = $region68
      $region67: #{tpu_custom_call.1} parent=5 // pred_region
        %s500 = ssub.s32 %s15, 2
      $region68: #{tpu_custom_call.1} parent=5 // pred_fallthru
        _
    $region6: #{tpu_custom_call.1} parent=1 // loop_footer
      %s19 = sadd.s32 1, %s15
    $region7: #{tpu_custom_call.1} parent=1 // loop_footer_branch
      %14 = sbr.rel target = $region3
    $region8: #{tpu_custom_call.1} parent=1 // loop_exit
      _
    %501 = vsyncpa [#allocation5], 1
    %s502 = scalar_lea.sflag [#allocation5], 1
    %503 = vsyncpa %s502, 1
    %504 = vsyncpa [#allocation8], 1
    %505 = vsyncpa [#allocation6], 1
    %s506 = scalar_lea.sflag [#allocation6], 1
    %507 = vsyncpa %s506, 1

// kernel: tpu_custom_call.1
$region0: #{tpu_custom_call.1}
  #allocation0 [shape = 'u32[]', space=smem, size = 0x4, offset = 0x4, fixed_abs, tag = 'smem constant byte address 0x4 - core index']
  #allocation1 [shape = 'u32[144,128]{1,0:T(1,128)}', space=vmem, size = 0x12000, scoped, tag = 'internal scratch']
  #allocation2 [shape = 'f32[2,32]{1,0:T(2,128)}', space=vmem, size = 0x400, scoped, tag = 'scratch operand']
  #allocation3 [shape = 'f32[2,32]{1,0:T(2,128)}', space=vmem, size = 0x400, scoped, tag = 'scratch operand']
  %s0 = inlined_call_operand.hbm [shape: f32[2,16,32], index: 0, kind: input, shape index: {}]
  %s1 = inlined_call_operand.hbm [shape: f32[32,128], index: 1, kind: input, shape index: {}]
  %s2 = inlined_call_operand.hbm [shape: f32[32,128], index: 2, kind: input, shape index: {}]
  %s3 = inlined_call_operand.vmem [shape: f32[1,128], index: 3, kind: input, shape index: {}]
  %s4 = inlined_call_operand.hbm [shape: f32[2,128], index: 4, kind: output, shape index: {}]
  %s5 = sld [smem:[#allocation0]]
  $region69: #{tpu_custom_call.1} parent=0
    _
  %s7 = ssub.s32 1, %s5
  %s8 = scalar_select 0, %s7, %s5
  $region1: #{tpu_custom_call.1} parent=0
    #allocation4 [shape = 'u8[16384]{0}', space=vmem, size = 0x4000, scoped, tag = 'input window, operand 0']
    #allocation5 [shape = 's32[2]{0}', space=sflag, size = 0x8, scoped, tag = 'scoped memory for tpu_custom_call.1']
    #allocation6 [shape = 's32[2]{0}', space=sflag, size = 0x8, scoped, tag = 'scoped memory for tpu_custom_call.1']
    #allocation7 [shape = 'u8[16384]{0}', space=vmem, size = 0x4000, scoped, tag = 'input window, operand 1, single buffered']
    #allocation8 [shape = 's32[1]{0}', space=sflag, size = 0x4, scoped, tag = 'scoped memory for tpu_custom_call.1']
    #allocation9 [shape = 'u8[16384]{0}', space=vmem, size = 0x4000, scoped, tag = 'input window, operand 2, single buffered']
    #allocation10 [shape = 'u8[1024]{0}', space=vmem, size = 0x400, scoped, tag = 'output window, operand 0, single buffered']
    %9 = vsyncpa [#allocation5], 0
    %s10 = scalar_lea.sflag [#allocation5], 1
    %11 = vsyncpa %s10, 0
    %12 = vsyncpa [#allocation8], 0
    %13 = vsyncpa [#allocation6], 0
    loop: start=0, step=1, limit=4
    $region2: #{tpu_custom_call.1} parent=1 // loop_pre_header
      _
    $region3: #{tpu_custom_call.1} parent=1 // loop_header
      %s15 = sphi 0, %s19
      %p16 = scmp.ge.s32.totalorder %s15, 4
      %s22 = sphi 0, %s34
      %s23 = sphi 0, %s30
      %s24 = sphi 0, %s22
      %s25 = sphi 0, %s23
      %s26 = sphi 0, %s24
      %s27 = sphi 0, %s25
      %s39 = sphi 0, %s41
      %s42 = sphi 0, %s39
      %s43 = sphi 0, %s42
      %s59 = sphi 0, %s43
      %s63 = sphi 0, %s63
      %s65 = sphi 0, %s63
      %s66 = sphi 0, %s65
      %s80 = sphi 0, %s66
      %s84 = sphi 0, %s84
      %s86 = sphi 0, %s84
      %s87 = sphi 0, %s86
      %s101 = sphi 0, %s87
      %s105 = sphi 0, %s105
      %s107 = sphi 0, %s105
      %s108 = sphi 0, %s107
      %s122 = sphi 0, %s108
      %s128 = sphi 0, %s130
      %s131 = sphi 0, %s128
      %s132 = sphi 0, %s131
      %s148 = sphi 0, %s132
    $region4: #{tpu_custom_call.1} parent=1 // loop_header_branch
      %18 = sbr.rel (%p16) target = $region8
    $region5: #{tpu_custom_call.1} parent=1 // loop_body
      %s20 = ssub.s32 %s15, 1
      %s21 = ssub.s32 %s15, 2
      %s28 = sadd.s32 1, %s23
      %p29 = scmp.ge.s32.totalorder %s28, 2
      %s30 = scalar_select %p29, 0, %s28
      %s31 = sadd.s32 1, %s22
      %s32 = scalar_select %p29, %s31, %s22
      %p33 = scmp.ge.s32.totalorder %s32, 1
      %s34 = scalar_select %p33, 0, %s32
      %s35 = ssub.s32 %s22, %s34
      %s36 = ssub.s32 %s23, %s30
      %s37 = sor.u32 %s35, %s36
      %p38 = scmp.eq.s32.totalorder %s37, 0
      %s40 = sadd.s32 %s39, 1
      %s41 = scalar_select %p38, %s39, %s40
      %p44 = pneg %p38
      %p45 = scmp.eq.s32.totalorder %s15, 1
      %p46 = por %p44, %p45
      %p47 = scmp.ne.s32.totalorder %s39, %s42
      %p48 = scmp.eq.s32.totalorder %s15, 0
      %p49 = por %p47, %p48
      %p50 = scmp.ne.s32.totalorder %s39, %s42
      %p51 = scmp.eq.s32.totalorder %s20, 1
      %p52 = por %p50, %p51
      %p53 = scmp.ne.s32.totalorder %s42, %s43
      %p54 = scmp.eq.s32.totalorder %s20, 0
      %p55 = por %p53, %p54
      %p56 = scmp.ne.s32.totalorder %s42, %s43
      %p57 = scmp.eq.s32.totalorder %s21, 1
      %p58 = por %p56, %p57
      %p60 = scmp.ne.s32.totalorder %s43, %s59
      %p61 = scmp.eq.s32.totalorder %s21, 0
      %p62 = por %p60, %p61
      %s64 = sadd.s32 %s63, 1
      %p67 = scmp.eq.s32.totalorder %s15, 1
      %p68 = scmp.ne.s32.totalorder %s63, %s65
      %p69 = scmp.eq.s32.totalorder %s15, 0
      %p70 = por %p68, %p69
      %p71 = scmp.ne.s32.totalorder %s63, %s65
      %p72 = scmp.eq.s32.totalorder %s20, 1
      %p73 = por %p71, %p72
      %p74 = scmp.ne.s32.totalorder %s65, %s66
      %p75 = scmp.eq.s32.totalorder %s20, 0
      %p76 = por %p74, %p75
      %p77 = scmp.ne.s32.totalorder %s65, %s66
      %p78 = scmp.eq.s32.totalorder %s21, 1
      %p79 = por %p77, %p78
      %p81 = scmp.ne.s32.totalorder %s66, %s80
      %p82 = scmp.eq.s32.totalorder %s21, 0
      %p83 = por %p81, %p82
      %s85 = sadd.s32 %s84, 1
      %p88 = scmp.eq.s32.totalorder %s15, 1
      %p89 = scmp.ne.s32.totalorder %s84, %s86
      %p90 = scmp.eq.s32.totalorder %s15, 0
      %p91 = por %p89, %p90
      %p92 = scmp.ne.s32.totalorder %s84, %s86
      %p93 = scmp.eq.s32.totalorder %s20, 1
      %p94 = por %p92, %p93
      %p95 = scmp.ne.s32.totalorder %s86, %s87
      %p96 = scmp.eq.s32.totalorder %s20, 0
      %p97 = por %p95, %p96
      %p98 = scmp.ne.s32.totalorder %s86, %s87
      %p99 = scmp.eq.s32.totalorder %s21, 1
      %p100 = por %p98, %p99
      %p102 = scmp.ne.s32.totalorder %s87, %s101
      %p103 = scmp.eq.s32.totalorder %s21, 0
      %p104 = por %p102, %p103
      %s106 = sadd.s32 %s105, 1
      %p109 = scmp.eq.s32.totalorder %s15, 1
      %p110 = scmp.ne.s32.totalorder %s105, %s107
      %p111 = scmp.eq.s32.totalorder %s15, 0
      %p112 = por %p110, %p111
      %p113 = scmp.ne.s32.totalorder %s105, %s107
      %p114 = scmp.eq.s32.totalorder %s20, 1
      %p115 = por %p113, %p114
      %p116 = scmp.ne.s32.totalorder %s107, %s108
      %p117 = scmp.eq.s32.totalorder %s20, 0
      %p118 = por %p116, %p117
      %p119 = scmp.ne.s32.totalorder %s107, %s108
      %p120 = scmp.eq.s32.totalorder %s21, 1
      %p121 = por %p119, %p120
      %p123 = scmp.ne.s32.totalorder %s108, %s122
      %p124 = scmp.eq.s32.totalorder %s21, 0
      %p125 = por %p123, %p124
      %s126 = ssub.s32 %s22, %s34
      %p127 = scmp.eq.s32.totalorder %s126, 0
      %s129 = sadd.s32 %s128, 1
      %s130 = scalar_select %p127, %s128, %s129
      %p133 = pneg %p127
      %p134 = scmp.eq.s32.totalorder %s15, 1
      %p135 = por %p133, %p134
      %p136 = scmp.ne.s32.totalorder %s128, %s131
      %p137 = scmp.eq.s32.totalorder %s15, 0
      %p138 = por %p136, %p137
      %p139 = scmp.ne.s32.totalorder %s128, %s131
      %p140 = scmp.eq.s32.totalorder %s20, 1
      %p141 = por %p139, %p140
      %p142 = scmp.ne.s32.totalorder %s131, %s132
      %p143 = scmp.eq.s32.totalorder %s20, 0
      %p144 = por %p142, %p143
      %p145 = scmp.ne.s32.totalorder %s131, %s132
      %p146 = scmp.eq.s32.totalorder %s21, 1
      %p147 = por %p145, %p146
      %p149 = scmp.ne.s32.totalorder %s132, %s148
      %p150 = scmp.eq.s32.totalorder %s21, 0
      %p151 = por %p149, %p150
      %p152 = scmp.le.s32.totalorder 1, %s15
      %p153 = scmp.lt.s32.totalorder %s15, 3
      %p154 = pnand %p152, %p153
      %p155 = pneg %p154
      // Predicated region
      $region9: #{tpu_custom_call.1} parent=5 // pred_check
        _
      $region10: #{tpu_custom_call.1} parent=5 // pred_check_branch
        %157 = sbr.rel (%p154) target = $region12
      $region11: #{tpu_custom_call.1} parent=5 // pred_region
        %s158 = ssub.s32 %s15, 1
        // Predicated region
        $region13: #{tpu_custom_call.1} parent=11 // pred_check
          %p159 = pneg %p76
        $region14: #{tpu_custom_call.1} parent=11 // pred_check_branch
          %161 = sbr.rel (%p159) target = $region16
        $region15: #{tpu_custom_call.1} parent=11 // pred_region
          %s163 = ssub.s32 512, 512
          %164 = vsyncadd [#allocation8], %s163
          %s165 = sshll.u32 [#allocation7], 4
          %s166 = int_to_ptr.vmem [resolvable:$true] %s165
          %171 = dma.hbm_to_vmem [thread:$0]  %s1, 512, %s166, [#allocation8], 128, 128, 8
        $region16: #{tpu_custom_call.1} parent=11 // pred_fallthru
          _
        // Predicated region
        $region17: #{tpu_custom_call.1} parent=11 // pred_check
          %p172 = pneg %p97
        $region18: #{tpu_custom_call.1} parent=11 // pred_check_branch
          %174 = sbr.rel (%p172) target = $region20
        $region19: #{tpu_custom_call.1} parent=11 // pred_region
          %s176 = ssub.s32 512, 512
          %177 = vsyncadd [#allocation8], %s176
          %s178 = sshll.u32 [#allocation9], 4
          %s179 = int_to_ptr.vmem [resolvable:$true] %s178
          %184 = dma.hbm_to_vmem [thread:$0]  %s2, 512, %s179, [#allocation8], 128, 128, 8
        $region20: #{tpu_custom_call.1} parent=11 // pred_fallthru
          _
        // Predicated region
        $region21: #{tpu_custom_call.1} parent=11 // pred_check
          %p185 = pneg %p118
        $region22: #{tpu_custom_call.1} parent=11 // pred_check_branch
          %187 = sbr.rel (%p185) target = $region24
        $region23: #{tpu_custom_call.1} parent=11 // pred_region
          _
        $region24: #{tpu_custom_call.1} parent=11 // pred_fallthru
          _
      $region12: #{tpu_custom_call.1} parent=5 // pred_fallthru
        _
      %p188 = scmp.lt.s32.totalorder %s15, 2
      // Predicated region
      $region25: #{tpu_custom_call.1} parent=5 // pred_check
        %p189 = pneg %p188
      $region26: #{tpu_custom_call.1} parent=5 // pred_check_branch
        %191 = sbr.rel (%p189) target = $region28
      $region27: #{tpu_custom_call.1} parent=5 // pred_region
        // Predicated region
        $region29: #{tpu_custom_call.1} parent=27 // pred_check
          %p192 = pneg %p49
        $region30: #{tpu_custom_call.1} parent=27 // pred_check_branch
          %194 = sbr.rel (%p192) target = $region32
        $region31: #{tpu_custom_call.1} parent=27 // pred_region
          %s195 = sand.u32 %s39, 1
          %s196 = scalar_lea.sflag [#allocation5], %s195
          %s197 = sand.u32 %s39, 1
          %s198 = smul.addr %s197, 16
          %s199 = scalar_lea.vmem [#allocation4], %s198
          %s200 = smul.u32 2, %s22
          %s202 = ssub.s32 256, 256
          %203 = vsyncadd %s196, %s202
          %s204 = smul.addr %s200, 2
          %s205 = sadd.s32 %s23, %s204
          %s206 = smul.addr %s205, 128
          %s207 = scalar_lea.hbm %s0, %s206
          %s208 = sshll.u32 %s199, 4
          %s209 = int_to_ptr.vmem [resolvable:$true] %s208
          %214 = dma.hbm_to_vmem [thread:$0]  %s207, 256, %s209, %s196, 256, 128, 8
        $region32: #{tpu_custom_call.1} parent=27 // pred_fallthru
          _
      $region28: #{tpu_custom_call.1} parent=5 // pred_fallthru
        _
      %p215 = scmp.le.s32.totalorder 1, %s15
      %p216 = scmp.lt.s32.totalorder %s15, 3
      %p217 = pnand %p215, %p216
      %p218 = pneg %p217
      // Predicated region
      $region33: #{tpu_custom_call.1} parent=5 // pred_check
        _
      $region34: #{tpu_custom_call.1} parent=5 // pred_check_branch
        %220 = sbr.rel (%p217) target = $region36
      $region35: #{tpu_custom_call.1} parent=5 // pred_region
        %s221 = ssub.s32 %s15, 1
        %s222 = sand.u32 %s42, 1
        %s223 = scalar_lea.sflag [#allocation5], %s222
        %s224 = sand.u32 %s42, 1
        %s225 = smul.addr %s224, 16
        %s226 = scalar_lea.vmem [#allocation4], %s225
        // Predicated region
        $region37: #{tpu_custom_call.1} parent=35 // pred_check
          %p227 = pneg %p55
        $region38: #{tpu_custom_call.1} parent=35 // pred_check_branch
          %229 = sbr.rel (%p227) target = $region40
        $region39: #{tpu_custom_call.1} parent=35 // pred_region
          %230 = dma.done %s223, 256
        $region40: #{tpu_custom_call.1} parent=35 // pred_fallthru
          _
        // Predicated region
        $region41: #{tpu_custom_call.1} parent=35 // pred_check
          %p231 = pneg %p76
        $region42: #{tpu_custom_call.1} parent=35 // pred_check_branch
          %233 = sbr.rel (%p231) target = $region44
        $region43: #{tpu_custom_call.1} parent=35 // pred_region
          %234 = dma.done [#allocation8], 512
        $region44: #{tpu_custom_call.1} parent=35 // pred_fallthru
          _
        // Predicated region
        $region45: #{tpu_custom_call.1} parent=35 // pred_check
          %p235 = pneg %p97
        $region46: #{tpu_custom_call.1} parent=35 // pred_check_branch
          %237 = sbr.rel (%p235) target = $region48
        $region47: #{tpu_custom_call.1} parent=35 // pred_region
          %238 = dma.done [#allocation8], 512
        $region48: #{tpu_custom_call.1} parent=35 // pred_fallthru
          _
        %s239 = sand.u32 %s42, 1
        %s240 = scalar_lea.sflag [#allocation5], %s239
        %s241 = sand.u32 %s42, 1
        %s242 = smul.addr %s241, 16
        %s243 = scalar_lea.vmem [#allocation4], %s242
        %p244 = pneg %p55
        %p245 = pneg %p52
        %p246 = pneg %p76
        %p247 = pneg %p73
        %p248 = pneg %p97
        %p249 = pneg %p94
        %p250 = pneg %p118
        %p251 = pneg %p115
        %p252 = pneg %p144
        %p253 = pneg %p141
        %s254 = smul.u32 2, %s24
        %p255 = scmp.eq.s32.totalorder %s25, 0
        // Predicated region
        $region49: #{tpu_custom_call.1} parent=35 // pred_check
          %p256 = pneg %p255
        $region50: #{tpu_custom_call.1} parent=35 // pred_check_branch
          %258 = sbr.rel (%p256) target = $region52
        $region51: #{tpu_custom_call.1} parent=35 // pred_region
          %vm259 = vcmask 254976
          %260 = vst.msk [vmem:[#allocation2] sm:$0x3] %vm259, -inf
          %261 = vst.msk [vmem:[#allocation3] sm:$0x3] %vm259, 0.0
        $region52: #{tpu_custom_call.1} parent=35 // pred_fallthru
          _
        %v262 = vld [vmem:[%s226] sm:$0xff]
        %v263 = vld [vmem:[%s226 + $0x8] sm:$0xff]
        %vm264 = vcmask 261120
        %v265 = vsel %vm264, %v262, -inf
        %v266 = vrot.slane %v265, 4
        %v267 = vmax.f32 %v265, %v266
        %v268 = vrot.slane %v267, 2
        %v269 = vmax.f32 %v267, %v268
        %v270 = vrot.slane %v269, 1
        %v271 = vmax.f32 %v269, %v270
        %v272 = vsel %vm264, %v263, -inf
        %v273 = vrot.slane %v272, 4
        %v274 = vmax.f32 %v272, %v273
        %v275 = vrot.slane %v274, 2
        %v276 = vmax.f32 %v274, %v275
        %v277 = vrot.slane %v276, 1
        %v278 = vmax.f32 %v276, %v277
        %v279 = vsel %vm264, %v262, 0.0
        %v280 = vrot.slane %v279, 4
        %v281 = vadd.f32 %v279, %v280
        %v282 = vrot.slane %v281, 2
        %v283 = vadd.f32 %v281, %v282
        %v284 = vrot.slane %v283, 1
        %v285 = vadd.f32 %v283, %v284
        %v286 = vsel %vm264, %v263, 0.0
        %v287 = vrot.slane %v286, 4
        %v288 = vadd.f32 %v286, %v287
        %v289 = vrot.slane %v288, 2
        %v290 = vadd.f32 %v288, %v289
        %v291 = vrot.slane %v290, 1
        %v292 = vadd.f32 %v290, %v291
        %v293 = vld [vmem:[#allocation2] sm:$0x3]
        %vm296 = vcmask 1041409
        %v297 = vsel %vm296, %v278, %v271
        %v299 = vmax.f32 %v293, %v297
        %vm300 = vcmask 254976
        %301 = vst.msk [vmem:[#allocation2] sm:$0x3] %vm300, %v299
        %v302 = vld [vmem:[#allocation3] sm:$0x3]
        %v305 = vsel %vm296, %v292, %v285
        %v307 = vadd.f32 %v302, %v305
        %308 = vst.msk [vmem:[#allocation3] sm:$0x3] %vm300, %v307
        %p309 = scmp.eq.s32.totalorder %s25, 1
        // Predicated region
        $region53: #{tpu_custom_call.1} parent=35 // pred_check
          %p310 = pneg %p309
        $region54: #{tpu_custom_call.1} parent=35 // pred_check_branch
          %312 = sbr.rel (%p310) target = $region56
        $region55: #{tpu_custom_call.1} parent=35 // pred_region
          %v313 = vld [vmem:[#allocation2] sm:$0x3]
          %v314 = vld [vmem:[#allocation3] sm:$0x3]
          %v315 = vmul.f32 %v314, 0.0625
          %v316 = vld [vmem:[#allocation7] sm:$0xff]
          %v317 = vld [vmem:[#allocation7 + $0x8] sm:$0xff]
          %v318 = vld [vmem:[#allocation7 + $0x10] sm:$0xff]
          %v319 = vld [vmem:[#allocation7 + $0x18] sm:$0xff]
          %v320 = vld [vmem:[#allocation9] sm:$0xff]
          %v321 = vld [vmem:[#allocation9 + $0x8] sm:$0xff]
          %v322 = vld [vmem:[#allocation9 + $0x10] sm:$0xff]
          %v323 = vld [vmem:[#allocation9 + $0x18] sm:$0xff]
          %v325 = vsel %vm264, %v315, 0
          %327 = vmatprep.subr.mxu0 0.0
          %328 = vmatpush1.msra.mxu0 %v320
          %329 = vmatprep.subr.mxu0 0.0
          %330 = vmatpush1.msra.mxu0 %v321
          %331 = vmatprep.subr.mxu0 0.0
          %332 = vmatpush1.msra.mxu0 %v322
          %333 = vmatprep.subr.mxu0 0.0
          %334 = vmatpush1.msra.mxu0 %v323
          %335 = vmatprep.subr.mxu0 0.0
          %336 = vmatpush1.msra.mxu0 0.0
          %337 = vmatprep.subr.mxu0 0.0
          %338 = vmatpush1.msra.mxu0 0.0
          %339 = vmatprep.subr.mxu0 0.0
          %340 = vmatpush1.msra.mxu0 0.0
          %341 = vmatprep.subr.mxu0 0.0
          %342 = vmatpush1.msra.mxu0 0.0
          %343 = vmatprep.subr.mxu0 0.0
          %344 = vmatpush1.msra.mxu0 0.0
          %345 = vmatprep.subr.mxu0 0.0
          %346 = vmatpush1.msra.mxu0 0.0
          %347 = vmatprep.subr.mxu0 0.0
          %348 = vmatpush1.msra.mxu0 0.0
          %349 = vmatprep.subr.mxu0 0.0
          %350 = vmatpush1.msra.mxu0 0.0
          %351 = vmatprep.subr.mxu0 0.0
          %352 = vmatpush1.msra.mxu0 0.0
          %353 = vmatprep.subr.mxu0 0.0
          %354 = vmatpush1.msra.mxu0 0.0
          %355 = vmatprep.subr.mxu0 0.0
          %356 = vmatpush1.msra.mxu0 0.0
          %357 = vmatprep.subr.mxu0 0.0
          %358 = vmatpush1.msra.mxu0 0.0
          %359 = vmatprep.subr.mxu0 0.0
          %360 = vmatpush1.msra.mxu0 0.0
          %361 = vmatprep.subr.mxu0 0.0
          %362 = vmatpush1.msra.mxu0 0.0
          %363 = vmatprep.subr.mxu0 0.0
          %364 = vmatpush1.msra.mxu0 0.0
          %365 = vmatprep.subr.mxu0 0.0
          %366 = vmatpush1.msra.mxu0 0.0
          %367 = vmatprep.subr.mxu0 0.0
          %368 = vmatpush1.msra.mxu0 0.0
          %369 = vmatprep.subr.mxu0 0.0
          %370 = vmatpush1.msra.mxu0 0.0
          %371 = vmatprep.subr.mxu0 0.0
          %372 = vmatpush1.msra.mxu0 0.0
          %373 = vmatprep.subr.mxu0 0.0
          %374 = vmatpush1.msra.mxu0 0.0
          %375 = vmatprep.subr.mxu0 0.0
          %376 = vmatpush1.msra.mxu0 0.0
          %377 = vmatprep.subr.mxu0 0.0
          %378 = vmatpush1.msra.mxu0 0.0
          %379 = vmatprep.subr.mxu0 0.0
          %380 = vmatpush1.msra.mxu0 0.0
          %381 = vmatprep.subr.mxu0 0.0
          %382 = vmatpush1.msra.mxu0 0.0
          %383 = vmatprep.subr.mxu0 0.0
          %384 = vmatpush1.msra.mxu0 0.0
          %385 = vmatprep.subr.mxu0 0.0
          %386 = vmatpush1.msra.mxu0 0.0
          %387 = vmatprep.subr.mxu0 0.0
          %388 = vmatpush1.msra.mxu0 0.0
          %389 = vmatprep.subr.mxu0 0.0
          %390 = vmatpush1.msra.mxu0 0.0
          %391 = vmatprep.mubr.f32.mxu0 0.0
          %392 = vmatmul.mubr.f32.gmra.mrb[0].mxu0 %v325
          %v393 = vpop.f32.mrb[0].mxu0
          %v394 = vadd.f32 0.0, %v393
          %v395 = vpop.f32.mrb[0].mxu0
          %396 = vdwg.mxu0
          %v398 = vsel %vm264, %v313, 0
          %400 = vmatprep.subr.mxu0 0.0
          %401 = vmatpush1.msra.mxu0 %v316
          %402 = vmatprep.subr.mxu0 0.0
          %403 = vmatpush1.msra.mxu0 %v317
          %404 = vmatprep.subr.mxu0 0.0
          %405 = vmatpush1.msra.mxu0 %v318
          %406 = vmatprep.subr.mxu0 0.0
          %407 = vmatpush1.msra.mxu0 %v319
          %408 = vmatprep.subr.mxu0 0.0
          %409 = vmatpush1.msra.mxu0 0.0
          %410 = vmatprep.subr.mxu0 0.0
          %411 = vmatpush1.msra.mxu0 0.0
          %412 = vmatprep.subr.mxu0 0.0
          %413 = vmatpush1.msra.mxu0 0.0
          %414 = vmatprep.subr.mxu0 0.0
          %415 = vmatpush1.msra.mxu0 0.0
          %416 = vmatprep.subr.mxu0 0.0
          %417 = vmatpush1.msra.mxu0 0.0
          %418 = vmatprep.subr.mxu0 0.0
          %419 = vmatpush1.msra.mxu0 0.0
          %420 = vmatprep.subr.mxu0 0.0
          %421 = vmatpush1.msra.mxu0 0.0
          %422 = vmatprep.subr.mxu0 0.0
          %423 = vmatpush1.msra.mxu0 0.0
          %424 = vmatprep.subr.mxu0 0.0
          %425 = vmatpush1.msra.mxu0 0.0
          %426 = vmatprep.subr.mxu0 0.0
          %427 = vmatpush1.msra.mxu0 0.0
          %428 = vmatprep.subr.mxu0 0.0
          %429 = vmatpush1.msra.mxu0 0.0
          %430 = vmatprep.subr.mxu0 0.0
          %431 = vmatpush1.msra.mxu0 0.0
          %432 = vmatprep.subr.mxu0 0.0
          %433 = vmatpush1.msra.mxu0 0.0
          %434 = vmatprep.subr.mxu0 0.0
          %435 = vmatpush1.msra.mxu0 0.0
          %436 = vmatprep.subr.mxu0 0.0
          %437 = vmatpush1.msra.mxu0 0.0
          %438 = vmatprep.subr.mxu0 0.0
          %439 = vmatpush1.msra.mxu0 0.0
          %440 = vmatprep.subr.mxu0 0.0
          %441 = vmatpush1.msra.mxu0 0.0
          %442 = vmatprep.subr.mxu0 0.0
          %443 = vmatpush1.msra.mxu0 0.0
          %444 = vmatprep.subr.mxu0 0.0
          %445 = vmatpush1.msra.mxu0 0.0
          %446 = vmatprep.subr.mxu0 0.0
          %447 = vmatpush1.msra.mxu0 0.0
          %448 = vmatprep.subr.mxu0 0.0
          %449 = vmatpush1.msra.mxu0 0.0
          %450 = vmatprep.subr.mxu0 0.0
          %451 = vmatpush1.msra.mxu0 0.0
          %452 = vmatprep.subr.mxu0 0.0
          %453 = vmatpush1.msra.mxu0 0.0
          %454 = vmatprep.subr.mxu0 0.0
          %455 = vmatpush1.msra.mxu0 0.0
          %456 = vmatprep.subr.mxu0 0.0
          %457 = vmatpush1.msra.mxu0 0.0
          %458 = vmatprep.subr.mxu0 0.0
          %459 = vmatpush1.msra.mxu0 0.0
          %460 = vmatprep.subr.mxu0 0.0
          %461 = vmatpush1.msra.mxu0 0.0
          %462 = vmatprep.subr.mxu0 0.0
          %463 = vmatpush1.msra.mxu0 0.0
          %464 = vmatprep.mubr.f32.mxu0 0.0
          %465 = vmatmul.mubr.f32.gmra.mrb[0].mxu0 %v398
          %v466 = vpop.f32.mrb[0].mxu0
          %v467 = vadd.f32 %v394, %v466
          %v468 = vpop.f32.mrb[0].mxu0
          %469 = vdwg.mxu0
          %v470 = vld [vmem:[%s3] sm:$0x1]
          %v472 = vlaneseq
          %v473 = vshrl.u32 %v472, 7
          %v474 = vsub.s32 0, %v473
          %v475 = vrot.slane %v470, %v474
          %v477 = vadd.f32 %v467, %v475
          %478 = vst [vmem:[#allocation10] sm:$0x3] %v477
        $region56: #{tpu_custom_call.1} parent=35 // pred_fallthru
          _
        // Predicated region
        $region57: #{tpu_custom_call.1} parent=35 // pred_check
          %p479 = pneg %p141
        $region58: #{tpu_custom_call.1} parent=35 // pred_check_branch
          %481 = sbr.rel (%p479) target = $region60
        $region59: #{tpu_custom_call.1} parent=35 // pred_region
          %s483 = ssub.s32 32, 32
          %484 = vsyncadd [#allocation6], %s483
          %s485 = smul.addr %s24, 32
          %s486 = scalar_lea.hbm %s4, %s485
          %s488 = sshll.u32 [#allocation10], 4
          %s489 = int_to_ptr.vmem [resolvable:$true] %s488
          %491 = dma.vmem_to_hbm [thread:$0]  %s489, 32, %s486, [#allocation6]
        $region60: #{tpu_custom_call.1} parent=35 // pred_fallthru
          _
        // Predicated region
        $region61: #{tpu_custom_call.1} parent=35 // pred_check
          %p492 = pneg %p141
        $region62: #{tpu_custom_call.1} parent=35 // pred_check_branch
          %494 = sbr.rel (%p492) target = $region64
        $region63: #{tpu_custom_call.1} parent=35 // pred_region
          %495 = dma.done [#allocation6], 32
        $region64: #{tpu_custom_call.1} parent=35 // pred_fallthru
          _
      $region36: #{tpu_custom_call.1} parent=5 // pred_fallthru
        _
      %p496 = scmp.le.s32.totalorder 2, %s15
      // Predicated region
      $region65: #{tpu_custom_call.1} parent=5 // pred_check
        %p497 = pneg %p496
      $region66: #{tpu_custom_call.1} parent=5 // pred_check_branch
        %499 = sbr.rel (%p497) target = $region68
      $region67: #{tpu_custom_call.1} parent=5 // pred_region
        %s500 = ssub.s32 %s15, 2
      $region68: #{tpu_custom_call.1} parent=5 // pred_fallthru
        _
    $region6: #{tpu_custom_call.1} parent=1 // loop_footer
      %s19 = sadd.s32 1, %s15
    $region7: #{tpu_custom_call.1} parent=1 // loop_footer_branch
      %14 = sbr.rel target = $region3
    $region8: #{tpu_custom_call.1} parent=1 // loop_exit
      _
    %501 = vsyncpa [#allocation5], 1
    %s502 = scalar_lea.sflag [#allocation5], 1
    %503 = vsyncpa %s502, 1
    %504 = vsyncpa [#allocation8], 1
    %505 = vsyncpa [#allocation6], 1
    %s506 = scalar_lea.sflag [#allocation6], 1
    %507 = vsyncpa %s506, 1

</llo_original>
